<compile_context>
chip_gen: v7x
topology: tpu7x:2x2x1
jax: 0.10.0
libtpu: 0.0.40
codegen_flags: <defaults>
</compile_context>

<pallas_src>
import functools
import math

import jax
import jax.numpy as jnp
from jax.experimental import pallas as pl
from jax.experimental.pallas import tpu as pltpu


def _pool_classify_kernel(x_ref, w_ref, b_ref, o_ref, acc_ref, *, hw, thw, need_mask):
    """One (n-tile, hw-tile) grid step of pool+classify.

    x_ref:   (TN, C, THW)  f32  channels-first feature-map tile (spatial on lanes)
    w_ref:   (C, OUT_PAD)  f32  classifier weight, pre-transposed, lane-padded,
                                with 1/HW folded in
    b_ref:   (1, OUT_PAD)  f32  classifier bias (lane-padded)
    o_ref:   (TN, OUT_PAD) f32  output tile (written on last reduction step)
    acc_ref: (TN, C)       f32  running spatial sum (scratch)
    """
    k = pl.program_id(1)

    @pl.when(k == 0)
    def _():
        acc_ref[...] = jnp.zeros_like(acc_ref)

    x = x_ref[...].astype(jnp.float32)                       # (TN, C, THW)
    if need_mask:
        # Ragged spatial tail: zero out-of-range lanes (select, so any OOB
        # garbage -- even NaN -- is dropped, never summed).
        lane = jax.lax.broadcasted_iota(jnp.int32, x.shape, 2) + k * thw
        x = jnp.where(lane < hw, x, 0.0)

    # Lane-axis reduction over the spatial tile (XLU; idle slot in this kernel).
    acc_ref[...] += jnp.sum(x, axis=-1)                      # (TN, C)

    @pl.when(k == pl.num_programs(1) - 1)
    def _():
        # 1/HW is already folded into w_ref by the wrapper.
        o_ref[...] = (
            jnp.dot(acc_ref[...], w_ref[...], preferred_element_type=jnp.float32)
            + b_ref[...]
        )


def _round_up(x, m):
    return ((x + m - 1) // m) * m


def _cdiv(a, b):
    return -(-a // b)


def submodel_forward(x_nchw, weight, bias):
    """Forward pass of Submodel after the subgraph.

    x_nchw: (N, C, H, W)  subgraph output feature map (consumed in-place, NCHW)
    weight: (OUT, C)      nn.Linear weight (PyTorch layout)
    bias:   (OUT,)        nn.Linear bias
    returns (N, OUT) f32
    """
    N, C, H, W = x_nchw.shape
    OUT = weight.shape[0]
    HW = H * W

    # Consume NCHW directly: collapsing the contiguous (H, W) dims is a free
    # reshape -- no relayout, no cast, no extra HBM pass.
    x = x_nchw.reshape(N, C, HW)
    x_bytes = jnp.dtype(x.dtype).itemsize

    # Lane-dense padded classifier (unmasked vst); fold 1/HW into the weight.
    OUT_PAD = _round_up(OUT, 128)
    w_t = jnp.zeros((C, OUT_PAD), jnp.float32).at[:, :OUT].set(
        (weight.T / float(HW)).astype(jnp.float32))
    b2 = jnp.zeros((1, OUT_PAD), jnp.float32).at[:, :OUT].set(
        bias.astype(jnp.float32))

    # --- generation-aware tile / VMEM budget ---------------------------------
    try:
        phys_vmem = int(pltpu.get_tpu_info().vmem_capacity_bytes)
    except Exception:                      # pragma: no cover
        phys_vmem = 64 << 20               # conservative (v7x per-TC)

    # Double-buffered x-pair budget: ~45% of physical VMEM, capped at 48 MiB
    # (v7x -> ~28 MiB pair, v5e/v6e -> 48 MiB pair).
    x_pair_budget = min(int(phys_vmem * 0.45), 48 << 20)

    # Batch tile: must be a multiple of 8 (or == N) for the output BlockSpec.
    tn_cap = 256 if phys_vmem >= (100 << 20) else 128
    tn = min(N, tn_cap)
    if tn != N and tn % 8 != 0:
        tn = max(8, (tn // 8) * 8)
    # Megacore: keep >= 2 batch tiles when N allows it (v7x has 2 TensorCores
    # sharing the "parallel" axis; the extra grid step is ~free on v5e/v6e).
    if _cdiv(N, tn) == 1 and N >= 16:
        tn = max(8, _round_up(_cdiv(N, 2), 8))
    # Shrink tn if even a 128-lane spatial tile would blow the x budget.
    while tn > 8 and 2 * tn * C * 128 * x_bytes > x_pair_budget:
        tn = max(8, ((tn // 2) // 8) * 8)

    per_buf = x_pair_budget // 2
    max_thw = max(1, per_buf // max(1, tn * C * x_bytes))
    if HW <= max_thw:
        thw = HW                                   # single reduction step
    else:
        thw = max(128, (max_thw // 128) * 128)     # lane-aligned spatial tile
        if thw >= HW:
            thw = HW
    need_mask = (HW % thw) != 0

    grid = (_cdiv(N, tn), _cdiv(HW, thw))

    # VMEM budget from the actual tile footprint, clamped below physical VMEM.
    acc_c = _round_up(max(C, 128), 128)
    vmem_bytes = (
        2 * tn * thw * C * x_bytes            # x, double-buffered
        + 2 * C * OUT_PAD * 4                 # w
        + 2 * OUT_PAD * 4                     # b
        + 2 * tn * OUT_PAD * 4                # out
        + _round_up(tn, 8) * acc_c * 4        # accumulator scratch
        + (2 << 20)                           # slack
    )
    vmem_bytes = int(min(max(vmem_bytes, 32 << 20), phys_vmem - (8 << 20)))

    kernel = functools.partial(
        _pool_classify_kernel, hw=HW, thw=thw, need_mask=need_mask)

    out_pad = pl.pallas_call(
        kernel,
        out_shape=jax.ShapeDtypeStruct((N, OUT_PAD), jnp.float32),
        grid_spec=pltpu.PrefetchScalarGridSpec(
            num_scalar_prefetch=0,
            grid=grid,
            in_specs=[
                pl.BlockSpec((tn, C, thw), lambda i, k: (i, 0, k)),
                pl.BlockSpec((C, OUT_PAD), lambda i, k: (0, 0)),
                pl.BlockSpec((1, OUT_PAD), lambda i, k: (0, 0)),
            ],
            out_specs=pl.BlockSpec((tn, OUT_PAD), lambda i, k: (i, 0)),
            scratch_shapes=[pltpu.VMEM((tn, C), jnp.float32)],
        ),
        compiler_params=pltpu.CompilerParams(
            dimension_semantics=("parallel", "arbitrary"),
            vmem_limit_bytes=vmem_bytes,
        ),
    )(x, w_t, b2)

    return out_pad[:, :OUT]


if __name__ == "__main__":
    # Module hyperparameters (small, consistent with __init__):
    #   size = 7, channels = 4, layers_between_halvings = 2, output_dim = 10
    #   => final channel count = 4 * 2 ** ((7 - 1) // 2) = 32
    size = 7
    channels = 4
    layers_between_halvings = 2
    output_dim = 10
    c_final = channels * 2 ** ((size - 1) // layers_between_halvings)  # 32

    N, H, W = 2, 4, 4

    key = jax.random.PRNGKey(0)
    kx, kw, kb = jax.random.split(key, 3)

    # Input: the subgraph's output feature map (NCHW).
    x = jax.random.normal(kx, (N, c_final, H, W), dtype=jnp.float32)

    # Deterministic nn.Linear-style init: U(-1/sqrt(fan_in), 1/sqrt(fan_in)).
    bound = 1.0 / math.sqrt(c_final)
    weight = jax.random.uniform(
        kw, (output_dim, c_final), minval=-bound, maxval=bound, dtype=jnp.float32
    )
    bias = jax.random.uniform(
        kb, (output_dim,), minval=-bound, maxval=bound, dtype=jnp.float32
    )

    out = submodel_forward(x, weight, bias)
    out = jax.block_until_ready(out)
    assert out.shape == (N, output_dim)

    # f32 reference (same math as the PyTorch forward).
    ref = x.mean(-1).mean(-1) @ weight.T + bias
    assert jnp.allclose(out, ref, atol=1e-4, rtol=1e-4), float(
        jnp.max(jnp.abs(out - ref)))

    print("KERNEL_OK")
</pallas_src>

<mosaic_0001>
module attributes {stable_mosaic.version = 11 : i64} {
  func.func @_pool_classify_kernel(%arg0: i32, %arg1: i32, %arg2: memref<2x32x16xf32, #tpu.memory_space<vmem>>, %arg3: memref<32x128xf32, #tpu.memory_space<vmem>>, %arg4: memref<1x128xf32, #tpu.memory_space<vmem>>, %arg5: memref<2x128xf32, #tpu.memory_space<vmem>>, %arg6: memref<2x32xf32, #tpu.memory_space<vmem>>) attributes {dimension_semantics = [#tpu.dimension_semantics<parallel>, #tpu.dimension_semantics<arbitrary>], iteration_bounds = array<i64: 1, 1>, scalar_prefetch = 0 : i64, scratch_operands = 1 : i64, tpu.core_type = #tpu.core_type<tc>, window_params = [{transform_indices = @transform_0, window_bounds = array<i64: 2, 32, 16>}, {pipeline_mode = #tpu.pipeline_mode<synchronous>, transform_indices = @transform_1, window_bounds = array<i64: 32, 128>}, {pipeline_mode = #tpu.pipeline_mode<synchronous>, transform_indices = @transform_2, window_bounds = array<i64: 1, 128>}, {transform_indices = @transform_3, window_bounds = array<i64: 2, 128>}]} {
    %c0_i32 = arith.constant 0 : i32
    %0 = arith.cmpi eq, %arg1, %c0_i32 : i32
    %1 = arith.extui %0 : i1 to i32
    %c0_i32_0 = arith.constant 0 : i32
    %2 = arith.cmpi ne, %1, %c0_i32_0 : i32
    scf.if %2 {
      %cst_9 = arith.constant 0.000000e+00 : f32
      %11 = vector.broadcast %cst_9 : f32 to vector<2x32xf32>
      %c0_10 = arith.constant 0 : index
      %c0_11 = arith.constant 0 : index
      %12 = vector.load %arg6[%c0_10, %c0_11] : memref<2x32xf32, #tpu.memory_space<vmem>>, vector<2x32xf32>
      tpu.vector_store %arg6[%c0_10, %c0_11], %11 {strides = array<i32>} : memref<2x32xf32, #tpu.memory_space<vmem>>, vector<2x32xf32>,
    } else {
    }
    %c0 = arith.constant 0 : index
    %c0_1 = arith.constant 0 : index
    %c0_2 = arith.constant 0 : index
    %3 = vector.load %arg2[%c0, %c0_1, %c0_2] : memref<2x32x16xf32, #tpu.memory_space<vmem>>, vector<2x32x16xf32>
    %c0_3 = arith.constant 0 : index
    %c0_4 = arith.constant 0 : index
    %4 = vector.load %arg6[%c0_3, %c0_4] : memref<2x32xf32, #tpu.memory_space<vmem>>, vector<2x32xf32>
    %cst = arith.constant dense<0.000000e+00> : vector<2x32xf32>
    %5 = vector.multi_reduction <add>, %3, %cst [2] : vector<2x32x16xf32> to vector<2x32xf32>
    %6 = arith.addf %4, %5 : vector<2x32xf32>
    %c0_5 = arith.constant 0 : index
    %c0_6 = arith.constant 0 : index
    %7 = vector.load %arg6[%c0_5, %c0_6] : memref<2x32xf32, #tpu.memory_space<vmem>>, vector<2x32xf32>
    tpu.vector_store %arg6[%c0_5, %c0_6], %6 {strides = array<i32>} : memref<2x32xf32, #tpu.memory_space<vmem>>, vector<2x32xf32>,
    %c0_i32_7 = arith.constant 0 : i32
    %8 = arith.cmpi eq, %arg1, %c0_i32_7 : i32
    %9 = arith.extui %8 : i1 to i32
    %c0_i32_8 = arith.constant 0 : i32
    %10 = arith.cmpi ne, %9, %c0_i32_8 : i32
    scf.if %10 {
      %c0_9 = arith.constant 0 : index
      %c0_10 = arith.constant 0 : index
      %11 = vector.load %arg6[%c0_9, %c0_10] : memref<2x32xf32, #tpu.memory_space<vmem>>, vector<2x32xf32>
      %c0_11 = arith.constant 0 : index
      %c0_12 = arith.constant 0 : index
      %12 = vector.load %arg3[%c0_11, %c0_12] : memref<32x128xf32, #tpu.memory_space<vmem>>, vector<32x128xf32>
      %cst_13 = arith.constant dense<0.000000e+00> : vector<2x128xf32>
      %13 = tpu.matmul %11, %12, %cst_13 {dimension_numbers = #tpu.dot_dimension_numbers<[1], [0], [0], [1], [0, 0, 1, 1], [], []>} : vector<2x32xf32>, vector<32x128xf32>, vector<2x128xf32> -> vector<2x128xf32>
      %c0_14 = arith.constant 0 : index
      %c0_15 = arith.constant 0 : index
      %14 = vector.load %arg4[%c0_14, %c0_15] : memref<1x128xf32, #tpu.memory_space<vmem>>, vector<1x128xf32>
      %15 = vector.broadcast %14 : vector<1x128xf32> to vector<2x128xf32>
      %16 = arith.addf %13, %15 : vector<2x128xf32>
      %c0_16 = arith.constant 0 : index
      %c0_17 = arith.constant 0 : index
      %17 = vector.load %arg5[%c0_16, %c0_17] : memref<2x128xf32, #tpu.memory_space<vmem>>, vector<2x128xf32>
      tpu.vector_store %arg5[%c0_16, %c0_17], %16 {strides = array<i32>} : memref<2x128xf32, #tpu.memory_space<vmem>>, vector<2x128xf32>,
    } else {
    }
    return
  }
  func.func @transform_0(%arg0: i32, %arg1: i32) -> (i32, i32, i32) {
    %c0_i32 = arith.constant 0 : i32
    %c0_i32_0 = arith.constant 0 : i32
    return %arg0, %c0_i32, %arg1 : i32, i32, i32
  }
  func.func @transform_1(%arg0: i32, %arg1: i32) -> (i32, i32) {
    %c0_i32 = arith.constant 0 : i32
    %c0_i32_0 = arith.constant 0 : i32
    %c0_i32_1 = arith.constant 0 : i32
    return %c0_i32, %c0_i32_0 : i32, i32
  }
  func.func @transform_2(%arg0: i32, %arg1: i32) -> (i32, i32) {
    %c0_i32 = arith.constant 0 : i32
    %c0_i32_0 = arith.constant 0 : i32
    %c0_i32_1 = arith.constant 0 : i32
    return %c0_i32, %c0_i32_0 : i32, i32
  }
  func.func @transform_3(%arg0: i32, %arg1: i32) -> (i32, i32) {
    %c0_i32 = arith.constant 0 : i32
    %c0_i32_0 = arith.constant 0 : i32
    return %arg0, %c0_i32 : i32, i32
  }
}

</mosaic_0001>

<llo_original>
// kernel: tpu_custom_call.1
$region0: #{tpu_custom_call.1}
  #allocation0 [shape = 'u32[]', space=smem, size = 0x4, offset = 0x4, fixed_abs, tag = 'smem constant byte address 0x4 - core index']
  #allocation1 [shape = 'u32[144,128]{1,0:T(1,128)}', space=vmem, size = 0x12000, scoped, tag = 'internal scratch']
  #allocation2 [shape = 'f32[2,32]{1,0:T(2,128)}', space=vmem, size = 0x400, scoped, tag = 'scratch operand']
  %s0 = inlined_call_operand.vmem [shape: f32[2,32,16], index: 0, kind: input, shape index: {}]
  %s1 = inlined_call_operand.vmem [shape: f32[32,128], index: 1, kind: input, shape index: {}]
  %s2 = inlined_call_operand.vmem [shape: f32[1,128], index: 2, kind: input, shape index: {}]
  %s3 = inlined_call_operand.hbm [shape: f32[2,128], index: 3, kind: output, shape index: {}]
  %s4 = sld [smem:[#allocation0]]
  $region30: #{tpu_custom_call.1} parent=0
    _
  %s6 = ssub.s32 1, %s4
  %s7 = scalar_select 0, %s6, %s4
  $region1: #{tpu_custom_call.1} parent=0
    #allocation3 [shape = 'u8[1024]{0}', space=vmem, size = 0x400, scoped, tag = 'output window, operand 0, single buffered']
    #allocation4 [shape = 's32[1]{0}', space=sflag, size = 0x4, scoped, tag = 'scoped memory for tpu_custom_call.1']
    %8 = vsyncpa [#allocation4], 0
    // Predicated region
    $region2: #{tpu_custom_call.1} parent=1 // pred_check
      _
    $region3: #{tpu_custom_call.1} parent=1 // pred_check_branch
      %10 = sbr.rel (0) target = $region5
    $region4: #{tpu_custom_call.1} parent=1 // pred_region
      _
    $region5: #{tpu_custom_call.1} parent=1 // pred_fallthru
      _
    // Predicated region
    $region6: #{tpu_custom_call.1} parent=1 // pred_check
      _
    $region7: #{tpu_custom_call.1} parent=1 // pred_check_branch
      %12 = sbr.rel (0) target = $region9
    $region8: #{tpu_custom_call.1} parent=1 // pred_region
      _
    $region9: #{tpu_custom_call.1} parent=1 // pred_fallthru
      _
    // Predicated region
    $region10: #{tpu_custom_call.1} parent=1 // pred_check
      _
    $region11: #{tpu_custom_call.1} parent=1 // pred_check_branch
      %14 = sbr.rel (0) target = $region13
    $region12: #{tpu_custom_call.1} parent=1 // pred_region
      _
    $region13: #{tpu_custom_call.1} parent=1 // pred_fallthru
      _
    %p15 = scmp.eq.s32.totalorder 0, 0
    // Predicated region
    $region14: #{tpu_custom_call.1} parent=1 // pred_check
      %p16 = pneg %p15
    $region15: #{tpu_custom_call.1} parent=1 // pred_check_branch
      %18 = sbr.rel (%p16) target = $region17
    $region16: #{tpu_custom_call.1} parent=1 // pred_region
      %vm19 = vcmask 254976
      %20 = vst.msk [vmem:[#allocation2] sm:$0x3] %vm19, 0.0
    $region17: #{tpu_custom_call.1} parent=1 // pred_fallthru
      _
    %v21 = vld [vmem:[%s0] sm:$0xff]
    %v22 = vld [vmem:[%s0 + $0x8] sm:$0xff]
    %v23 = vld [vmem:[%s0 + $0x10] sm:$0xff]
    %v24 = vld [vmem:[%s0 + $0x18] sm:$0xff]
    %v25 = vld [vmem:[%s0 + $0x20] sm:$0xff]
    %v26 = vld [vmem:[%s0 + $0x28] sm:$0xff]
    %v27 = vld [vmem:[%s0 + $0x30] sm:$0xff]
    %v28 = vld [vmem:[%s0 + $0x38] sm:$0xff]
    %v29 = vld [vmem:[#allocation2] sm:$0x3]
    %vm30 = vcmask 130048
    %v31 = vsel %vm30, %v21, 0.0
    %32 = vadd.xlane.f32.xlu0 %v31
    %v33 = vpop.xlane.xlu0 %32
    %v34 = vsel %vm30, %v22, 0.0
    %35 = vadd.xlane.f32.xlu0 %v34
    %v36 = vpop.xlane.xlu0 %35
    %v37 = vsel %vm30, %v23, 0.0
    %38 = vadd.xlane.f32.xlu0 %v37
    %v39 = vpop.xlane.xlu0 %38
    %v40 = vsel %vm30, %v24, 0.0
    %41 = vadd.xlane.f32.xlu0 %v40
    %v42 = vpop.xlane.xlu0 %41
    %v43 = vsel %vm30, %v25, 0.0
    %44 = vadd.xlane.f32.xlu0 %v43
    %v45 = vpop.xlane.xlu0 %44
    %v46 = vsel %vm30, %v26, 0.0
    %47 = vadd.xlane.f32.xlu0 %v46
    %v48 = vpop.xlane.xlu0 %47
    %v49 = vsel %vm30, %v27, 0.0
    %50 = vadd.xlane.f32.xlu0 %v49
    %v51 = vpop.xlane.xlu0 %50
    %v52 = vsel %vm30, %v28, 0.0
    %53 = vadd.xlane.f32.xlu0 %v52
    %v54 = vpop.xlane.xlu0 %53
    %v63 = vlaneseq
    %v64 = vand.u32 %v63, 127
    %v65 = vlaneseq
    %v66 = vshrl.u32 %v65, 7
    %v67 = vsub.s32 %v64, %v66
    %v68 = vrot.slane %v33, %v67
    %v69 = vadd.s32 %v64, 4294967288
    %v70 = vlaneseq
    %v71 = vshrl.u32 %v70, 7
    %v72 = vsub.s32 %v69, %v71
    %v73 = vrot.slane %v36, %v72
    %vm74 = vcmask 130112
    %v75 = vsel %vm74, %v73, %v68
    %v76 = vadd.s32 %v64, 4294967280
    %v77 = vlaneseq
    %v78 = vshrl.u32 %v77, 7
    %v79 = vsub.s32 %v76, %v78
    %v80 = vrot.slane %v39, %v79
    %vm81 = vcmask 195712
    %v82 = vsel %vm81, %v80, %v75
    %v83 = vadd.s32 %v64, 4294967272
    %v84 = vlaneseq
    %v85 = vshrl.u32 %v84, 7
    %v86 = vsub.s32 %v83, %v85
    %v87 = vrot.slane %v42, %v86
    %vm88 = vcmask 261312
    %v89 = vsel %vm88, %v87, %v82
    %v90 = vlaneseq
    %v91 = vshrl.u32 %v90, 7
    %v92 = vsub.s32 %v64, %v91
    %v93 = vrot.slane %v45, %v92
    %v94 = vlaneseq
    %v95 = vshrl.u32 %v94, 7
    %v96 = vsub.s32 %v69, %v95
    %v97 = vrot.slane %v48, %v96
    %v98 = vsel %vm74, %v97, %v93
    %v99 = vlaneseq
    %v100 = vshrl.u32 %v99, 7
    %v101 = vsub.s32 %v76, %v100
    %v102 = vrot.slane %v51, %v101
    %v103 = vsel %vm81, %v102, %v98
    %v104 = vlaneseq
    %v105 = vshrl.u32 %v104, 7
    %v106 = vsub.s32 %v83, %v105
    %v107 = vrot.slane %v54, %v106
    %v108 = vsel %vm88, %v107, %v103
    %vm109 = vcmask 1041409
    %v110 = vsel %vm109, %v108, %v89
    %v112 = vadd.f32 %v29, %v110
    %vm113 = vcmask 254976
    %114 = vst.msk [vmem:[#allocation2] sm:$0x3] %vm113, %v112
    // Predicated region
    $region18: #{tpu_custom_call.1} parent=1 // pred_check
      %p115 = pneg %p15
    $region19: #{tpu_custom_call.1} parent=1 // pred_check_branch
      %117 = sbr.rel (%p115) target = $region21
    $region20: #{tpu_custom_call.1} parent=1 // pred_region
      %v118 = vld [vmem:[#allocation2] sm:$0x3]
      %v119 = vld [vmem:[%s1] sm:$0xff]
      %v120 = vld [vmem:[%s1 + $0x8] sm:$0xff]
      %v121 = vld [vmem:[%s1 + $0x10] sm:$0xff]
      %v122 = vld [vmem:[%s1 + $0x18] sm:$0xff]
      %v123 = vld [vmem:[%s2] sm:$0x1]
      %v125 = vlaneseq
      %v126 = vshrl.u32 %v125, 7
      %v127 = vsub.s32 0, %v126
      %v128 = vrot.slane %v123, %v127
      %vm130 = vcmask 261120
      %v132 = vsel %vm130, %v118, 0
      %134 = vmatprep.subr.mxu0 0.0
      %135 = vmatpush1.msra.mxu0 %v119
      %136 = vmatprep.subr.mxu0 0.0
      %137 = vmatpush1.msra.mxu0 %v120
      %138 = vmatprep.subr.mxu0 0.0
      %139 = vmatpush1.msra.mxu0 %v121
      %140 = vmatprep.subr.mxu0 0.0
      %141 = vmatpush1.msra.mxu0 %v122
      %142 = vmatprep.subr.mxu0 0.0
      %143 = vmatpush1.msra.mxu0 0.0
      %144 = vmatprep.subr.mxu0 0.0
      %145 = vmatpush1.msra.mxu0 0.0
      %146 = vmatprep.subr.mxu0 0.0
      %147 = vmatpush1.msra.mxu0 0.0
      %148 = vmatprep.subr.mxu0 0.0
      %149 = vmatpush1.msra.mxu0 0.0
      %150 = vmatprep.subr.mxu0 0.0
      %151 = vmatpush1.msra.mxu0 0.0
      %152 = vmatprep.subr.mxu0 0.0
      %153 = vmatpush1.msra.mxu0 0.0
      %154 = vmatprep.subr.mxu0 0.0
      %155 = vmatpush1.msra.mxu0 0.0
      %156 = vmatprep.subr.mxu0 0.0
      %157 = vmatpush1.msra.mxu0 0.0
      %158 = vmatprep.subr.mxu0 0.0
      %159 = vmatpush1.msra.mxu0 0.0
      %160 = vmatprep.subr.mxu0 0.0
      %161 = vmatpush1.msra.mxu0 0.0
      %162 = vmatprep.subr.mxu0 0.0
      %163 = vmatpush1.msra.mxu0 0.0
      %164 = vmatprep.subr.mxu0 0.0
      %165 = vmatpush1.msra.mxu0 0.0
      %166 = vmatprep.subr.mxu0 0.0
      %167 = vmatpush1.msra.mxu0 0.0
      %168 = vmatprep.subr.mxu0 0.0
      %169 = vmatpush1.msra.mxu0 0.0
      %170 = vmatprep.subr.mxu0 0.0
      %171 = vmatpush1.msra.mxu0 0.0
      %172 = vmatprep.subr.mxu0 0.0
      %173 = vmatpush1.msra.mxu0 0.0
      %174 = vmatprep.subr.mxu0 0.0
      %175 = vmatpush1.msra.mxu0 0.0
      %176 = vmatprep.subr.mxu0 0.0
      %177 = vmatpush1.msra.mxu0 0.0
      %178 = vmatprep.subr.mxu0 0.0
      %179 = vmatpush1.msra.mxu0 0.0
      %180 = vmatprep.subr.mxu0 0.0
      %181 = vmatpush1.msra.mxu0 0.0
      %182 = vmatprep.subr.mxu0 0.0
      %183 = vmatpush1.msra.mxu0 0.0
      %184 = vmatprep.subr.mxu0 0.0
      %185 = vmatpush1.msra.mxu0 0.0
      %186 = vmatprep.subr.mxu0 0.0
      %187 = vmatpush1.msra.mxu0 0.0
      %188 = vmatprep.subr.mxu0 0.0
      %189 = vmatpush1.msra.mxu0 0.0
      %190 = vmatprep.subr.mxu0 0.0
      %191 = vmatpush1.msra.mxu0 0.0
      %192 = vmatprep.subr.mxu0 0.0
      %193 = vmatpush1.msra.mxu0 0.0
      %194 = vmatprep.subr.mxu0 0.0
      %195 = vmatpush1.msra.mxu0 0.0
      %196 = vmatprep.subr.mxu0 0.0
      %197 = vmatpush1.msra.mxu0 0.0
      %198 = vmatprep.mubr.f32.mxu0 0.0
      %199 = vmatmul.mubr.f32.gmra.mrb[0].mxu0 %v132
      %v200 = vpop.f32.mrb[0].mxu0
      %v201 = vadd.f32 %v128, %v200
      %v202 = vpop.f32.mrb[0].mxu0
      %203 = vdwg.mxu0
      %204 = vst [vmem:[#allocation3] sm:$0x3] %v201
    $region21: #{tpu_custom_call.1} parent=1 // pred_fallthru
      _
    // Predicated region
    $region22: #{tpu_custom_call.1} parent=1 // pred_check
      _
    $region23: #{tpu_custom_call.1} parent=1 // pred_check_branch
      %206 = sbr.rel (0) target = $region25
    $region24: #{tpu_custom_call.1} parent=1 // pred_region
      %s208 = ssub.s32 32, 32
      %209 = vsyncadd [#allocation4], %s208
      %s211 = sshll.u32 [#allocation3], 4
      %s212 = int_to_ptr.vmem [resolvable:$true] %s211
      %214 = dma.vmem_to_hbm [thread:$0]  %s212, 32, %s3, [#allocation4]
    $region25: #{tpu_custom_call.1} parent=1 // pred_fallthru
      _
    // Predicated region
    $region26: #{tpu_custom_call.1} parent=1 // pred_check
      _
    $region27: #{tpu_custom_call.1} parent=1 // pred_check_branch
      %216 = sbr.rel (0) target = $region29
    $region28: #{tpu_custom_call.1} parent=1 // pred_region
      %217 = dma.done [#allocation4], 32
    $region29: #{tpu_custom_call.1} parent=1 // pred_fallthru
      _
    %218 = vsyncpa [#allocation4], 1

</llo_original>
